<compile_context>
chip_gen: v5e
topology: v5e:2x2
jax: 0.10.0
libtpu: 0.0.40
codegen_flags: <defaults>
</compile_context>

<pallas_src>
import functools

import jax
import jax.numpy as jnp
from jax.experimental import pallas as pl
from jax.experimental.pallas import tpu as pltpu

_LANE = 128
_MAX_BLOCK_ROWS = 1024  # 1024 * 128 * 4B = 512 KiB per f32 block


def _round_up(a, b):
    return (a + b - 1) // b * b


def _cutoff_sigmoid(x_f32, cutoff):
    return jnp.maximum((1.0 + cutoff) * jax.nn.sigmoid(x_f32) - cutoff, 0.0)


def _partial_sum_kernel(x_ref, psum_ref, *, cutoff, n_valid, block_rows,
                        mask_tail):
    """Per-block lane-wise partial sums of y (x read once, no y writeback)."""
    x = x_ref[...].astype(jnp.float32)
    y = _cutoff_sigmoid(x, cutoff)
    if mask_tail:
        i = pl.program_id(0)
        row = jax.lax.broadcasted_iota(jnp.int32, x.shape, 0)
        lane = jax.lax.broadcasted_iota(jnp.int32, x.shape, 1)
        flat = (i * block_rows + row) * _LANE + lane
        y = jnp.where(flat < n_valid, y, 0.0)
    psum_ref[...] = jnp.sum(y, axis=0, keepdims=True)  # (1, 128)


def _scale_clamp_kernel(scale_ref, x_ref, out_ref, *, cutoff):
    """Recompute y, apply global scale, clamp to [0, 1], emit in orig dtype."""
    s = scale_ref[0]
    x = x_ref[...].astype(jnp.float32)
    y = _cutoff_sigmoid(x, cutoff)
    out_ref[...] = jnp.clip(y * s, 0.0, 1.0).astype(out_ref.dtype)


def cutoff_scale_sigmoid(x, running_mean, *, cutoff=1.0, mean=0.5,
                         momentum=0.1, training=True):
    """Forward pass of CutoffScaleSigmoid.

    Returns (output, new_running_mean). `running_mean` is a scalar f32 array.
    """
    orig_shape = x.shape
    orig_dtype = x.dtype
    n = x.size

    rows = pl.cdiv(n, _LANE)
    padded_n = rows * _LANE
    if padded_n == n:
        x2 = x.reshape(rows, _LANE)          # free reshape, no extra HBM pass
    else:
        # Rare ragged case: pad the flat tail up to a full lane row.  The pad
        # value is irrelevant (reduction is iota-masked, output is sliced).
        x2 = jnp.pad(x.reshape(-1), (0, padded_n - n)).reshape(rows, _LANE)

    # Biggest block that fits comfortably: full array for small inputs,
    # 1024 rows otherwise (always a multiple of 8 or equal to the full dim).
    if rows <= _MAX_BLOCK_ROWS:
        block_rows = rows
    else:
        block_rows = _MAX_BLOCK_ROWS
    grid = (pl.cdiv(rows, block_rows),)
    covered = grid[0] * block_rows * _LANE
    mask_tail = covered != n  # lane padding and/or ragged last block present

    # --- kernel 1: per-block lane-wise partial sums of y ---
    psums = pl.pallas_call(
        functools.partial(_partial_sum_kernel, cutoff=float(cutoff),
                          n_valid=n, block_rows=block_rows,
                          mask_tail=mask_tail),
        grid=grid,
        in_specs=[pl.BlockSpec((block_rows, _LANE), lambda i: (i, 0))],
        out_specs=pl.BlockSpec((1, _LANE), lambda i: (i, 0)),
        out_shape=jax.ShapeDtypeStruct((grid[0], _LANE), jnp.float32),
        compiler_params=pltpu.CompilerParams(
            dimension_semantics=("parallel",)),
    )(x2)

    y_mean = jnp.sum(psums) / jnp.float32(n)  # detached in torch; fwd only

    running_mean = jnp.asarray(running_mean, jnp.float32)
    if training:
        new_running_mean = running_mean + momentum * (y_mean - running_mean)
        denom = y_mean
    else:
        new_running_mean = running_mean
        denom = running_mean

    scale = jnp.reshape(jnp.float32(mean) / denom, (1,)).astype(jnp.float32)

    # --- kernel 2: recompute y (EUP slack), scale + clamp(0, 1) ---
    out2 = pl.pallas_call(
        functools.partial(_scale_clamp_kernel, cutoff=float(cutoff)),
        grid=grid,
        in_specs=[
            pl.BlockSpec(memory_space=pltpu.SMEM),
            pl.BlockSpec((block_rows, _LANE), lambda i: (i, 0)),
        ],
        out_specs=pl.BlockSpec((block_rows, _LANE), lambda i: (i, 0)),
        out_shape=jax.ShapeDtypeStruct((rows, _LANE), orig_dtype),
        compiler_params=pltpu.CompilerParams(
            dimension_semantics=("parallel",)),
    )(scale, x2)

    if padded_n == n:
        out = out2.reshape(orig_shape)
    else:
        out = out2.reshape(-1)[:n].reshape(orig_shape)
    return out, new_running_mean


def _reference(x, running_mean, *, cutoff=1.0, mean=0.5, momentum=0.1,
               training=True):
    xf = x.astype(jnp.float32)
    y = jnp.maximum((1.0 + cutoff) * jax.nn.sigmoid(xf) - cutoff, 0.0)
    y_mean = jnp.mean(y)
    if training:
        new_rm = running_mean + momentum * (y_mean - running_mean)
        ret = jnp.clip(y * mean / y_mean, 0.0, 1.0)
    else:
        new_rm = running_mean
        ret = jnp.clip(y * mean / running_mean, 0.0, 1.0)
    return ret.astype(x.dtype), new_rm


if __name__ == "__main__":
    key = jax.random.PRNGKey(0)
    x = jax.random.normal(key, (2, 4, 16, 16), dtype=jnp.float32)  # NCHW
    running_mean = jnp.float32(0.5)  # deterministic init, as in __init__

    # training-mode forward
    out_tr, rm_tr = cutoff_scale_sigmoid(x, running_mean, training=True)
    out_tr = jax.block_until_ready(out_tr)
    ref_tr, ref_rm_tr = _reference(x, running_mean, training=True)

    # eval-mode forward
    out_ev, rm_ev = cutoff_scale_sigmoid(x, running_mean, training=False)
    out_ev = jax.block_until_ready(out_ev)
    ref_ev, _ = _reference(x, running_mean, training=False)

    assert out_tr.shape == x.shape and out_tr.dtype == x.dtype
    assert jnp.allclose(out_tr, ref_tr, atol=1e-5, rtol=1e-5)
    assert jnp.allclose(rm_tr, ref_rm_tr, atol=1e-6, rtol=1e-6)
    assert jnp.allclose(out_ev, ref_ev, atol=1e-5, rtol=1e-5)

    # ragged case (numel not a multiple of 128) exercises the iota-mask path
    x_odd = jax.random.normal(jax.random.PRNGKey(1), (3, 5, 7, 11),
                              dtype=jnp.float32)
    out_odd, rm_odd = cutoff_scale_sigmoid(x_odd, running_mean, training=True)
    out_odd = jax.block_until_ready(out_odd)
    ref_odd, ref_rm_odd = _reference(x_odd, running_mean, training=True)
    assert out_odd.shape == x_odd.shape
    assert jnp.allclose(out_odd, ref_odd, atol=1e-5, rtol=1e-5)
    assert jnp.allclose(rm_odd, ref_rm_odd, atol=1e-6, rtol=1e-6)

    print("KERNEL_OK")
</pallas_src>

<mosaic_0001>
module attributes {stable_mosaic.version = 11 : i64} {
  func.func @_partial_sum_kernel(%arg0: i32, %arg1: memref<16x128xf32, #tpu.memory_space<vmem>>, %arg2: memref<1x128xf32, #tpu.memory_space<vmem>>) attributes {dimension_semantics = [#tpu.dimension_semantics<parallel>], iteration_bounds = array<i64: 1>, scalar_prefetch = 0 : i64, scratch_operands = 0 : i64, tpu.core_type = #tpu.core_type<tc>, window_params = [{transform_indices = @transform_0, window_bounds = array<i64: 16, 128>}, {transform_indices = @transform_1, window_bounds = array<i64: 1, 128>}]} {
    %c0 = arith.constant 0 : index
    %c0_0 = arith.constant 0 : index
    %0 = vector.load %arg1[%c0, %c0_0] : memref<16x128xf32, #tpu.memory_space<vmem>>, vector<16x128xf32>
    %1 = arith.negf %0 : vector<16x128xf32>
    %2 = math.exp %1 : vector<16x128xf32>
    %cst = arith.constant 1.000000e+00 : f32
    %3 = vector.broadcast %cst : f32 to vector<16x128xf32>
    %4 = arith.addf %3, %2 : vector<16x128xf32>
    %5 = arith.divf %3, %4 : vector<16x128xf32>
    %cst_1 = arith.constant 2.000000e+00 : f32
    %6 = vector.broadcast %cst_1 : f32 to vector<16x128xf32>
    %7 = arith.mulf %6, %5 : vector<16x128xf32>
    %cst_2 = arith.constant 1.000000e+00 : f32
    %8 = vector.broadcast %cst_2 : f32 to vector<16x128xf32>
    %9 = arith.subf %7, %8 : vector<16x128xf32>
    %cst_3 = arith.constant 0.000000e+00 : f32
    %10 = vector.broadcast %cst_3 : f32 to vector<16x128xf32>
    %11 = arith.maximumf %9, %10 : vector<16x128xf32>
    %cst_4 = arith.constant dense<0.000000e+00> : vector<128xf32>
    %12 = vector.multi_reduction <add>, %11, %cst_4 [0] : vector<16x128xf32> to vector<128xf32>
    %13 = vector.shape_cast %12 : vector<128xf32> to vector<1x128xf32>
    %c0_5 = arith.constant 0 : index
    %c0_6 = arith.constant 0 : index
    %14 = vector.load %arg2[%c0_5, %c0_6] : memref<1x128xf32, #tpu.memory_space<vmem>>, vector<1x128xf32>
    tpu.vector_store %arg2[%c0_5, %c0_6], %13 {strides = array<i32>} : memref<1x128xf32, #tpu.memory_space<vmem>>, vector<1x128xf32>,
    return
  }
  func.func @transform_0(%arg0: i32) -> (i32, i32) {
    %c0_i32 = arith.constant 0 : i32
    %c0_i32_0 = arith.constant 0 : i32
    return %arg0, %c0_i32 : i32, i32
  }
  func.func @transform_1(%arg0: i32) -> (i32, i32) {
    %c0_i32 = arith.constant 0 : i32
    %c0_i32_0 = arith.constant 0 : i32
    return %arg0, %c0_i32 : i32, i32
  }
}

</mosaic_0001>

<llo_original>
// kernel: tpu_custom_call.1
$region0: #{tpu_custom_call.1}
  #allocation0 [shape = 'u32[]', space=smem, size = 0x4, offset = 0x4, fixed_abs, tag = 'smem constant byte address 0x4 - core index']
  #allocation1 [shape = 'u32[72,128]{1,0:T(1,128)}', space=vmem, size = 0x9000, scoped, tag = 'internal scratch']
  %s0 = inlined_call_operand.hbm [shape: f32[16,128], index: 0, kind: input, shape index: {}]
  %s1 = inlined_call_operand.hbm [shape: f32[1,128], index: 1, kind: output, shape index: {}]
  %s2 = sld [smem:[#allocation0]]
  $region18: #{tpu_custom_call.1} parent=0
    _
  %s4 = ssub.s32 1, %s2
  %s5 = scalar_select 0, %s4, %s2
  $region1: #{tpu_custom_call.1} parent=0
    #allocation2 [shape = 'u8[8192]{0}', space=vmem, size = 0x2000, scoped, tag = 'input window, operand 0, single buffered']
    #allocation3 [shape = 's32[1]{0}', space=sflag, size = 0x4, scoped, tag = 'scoped memory for tpu_custom_call.1']
    #allocation4 [shape = 's32[1]{0}', space=sflag, size = 0x4, scoped, tag = 'scoped memory for tpu_custom_call.1']
    #allocation5 [shape = 'u8[512]{0}', space=vmem, size = 0x400, scoped, tag = 'output window, operand 0, single buffered']
    %6 = vsyncpa [#allocation3], 0
    %7 = vsyncpa [#allocation4], 0
    // Predicated region
    $region2: #{tpu_custom_call.1} parent=1 // pred_check
      _
    $region3: #{tpu_custom_call.1} parent=1 // pred_check_branch
      %9 = sbr.rel (0) target = $region5
    $region4: #{tpu_custom_call.1} parent=1 // pred_region
      %11 = vsyncadd [#allocation3], 0
      %s12 = sshll.u32 %s0, 4
      %s13 = int_to_ptr.hbm [resolvable:$true] %s12
      %s14 = sshll.u32 [#allocation2], 4
      %s15 = int_to_ptr.vmem [resolvable:$true] %s14
      %20 = dma.hbm_to_vmem [thread:$0]  %s13, 256, %s15, [#allocation3], 128, 128, 8
    $region5: #{tpu_custom_call.1} parent=1 // pred_fallthru
      _
    // Predicated region
    $region6: #{tpu_custom_call.1} parent=1 // pred_check
      _
    $region7: #{tpu_custom_call.1} parent=1 // pred_check_branch
      %22 = sbr.rel (0) target = $region9
    $region8: #{tpu_custom_call.1} parent=1 // pred_region
      %24 = dma.done [#allocation3], 256
    $region9: #{tpu_custom_call.1} parent=1 // pred_fallthru
      _
    %v25 = vld [vmem:[#allocation2] sm:$0xff]
    %v26 = vld [vmem:[#allocation2 + $0x8] sm:$0xff]
    %v27 = vxor.u32 %v25, 2147483648
    %v28 = vxor.u32 %v26, 2147483648
    %v29 = vmul.f32 %v27, 1.442695
    %v30 = vpow.pop %v29
    %v31 = vmul.f32 %v28, 1.442695
    %v32 = vpow.pop %v31
    %v33 = vadd.f32 %v30, 1.0
    %v34 = vadd.f32 %v32, 1.0
    %v35 = vrcp.pop %v33
    %v36 = vmul.f32 %v33, %v35
    %v37 = vsub.f32 1.0, %v36
    %v38 = vmul.f32 %v35, %v37
    %v39 = vadd.f32 %v35, %v38
    %vm40 = vweird.f32 %v33
    %vm41 = vweird.f32 %v35
    %vm42 = vmor %vm40, %vm41
    %v43 = vsel %vm42, %v35, %v39
    %v44 = vand.u32 2147483647, %v33
    %vm45 = vcmp.eq.f32.partialorder %v44, 8.507059e+37
    %v46 = vand.u32 %v33, 2147483648
    %v47 = vor.u32 1.1754944e-38, %v46
    %v48 = vsel %vm45, %v47, %v43
    %v49 = vmul.f32 1.0, %v48
    %v50 = vrcp.pop %v34
    %v51 = vmul.f32 %v34, %v50
    %v52 = vsub.f32 1.0, %v51
    %v53 = vmul.f32 %v50, %v52
    %v54 = vadd.f32 %v50, %v53
    %vm55 = vweird.f32 %v34
    %vm56 = vweird.f32 %v50
    %vm57 = vmor %vm55, %vm56
    %v58 = vsel %vm57, %v50, %v54
    %v59 = vand.u32 2147483647, %v34
    %vm60 = vcmp.eq.f32.partialorder %v59, 8.507059e+37
    %v61 = vand.u32 %v34, 2147483648
    %v62 = vor.u32 1.1754944e-38, %v61
    %v63 = vsel %vm60, %v62, %v58
    %v64 = vmul.f32 1.0, %v63
    %v65 = vmul.f32 %v49, 2.0
    %v66 = vmul.f32 %v64, 2.0
    %v67 = vsub.f32 %v65, 1.0
    %v68 = vsub.f32 %v66, 1.0
    %v69 = vmax.f32 %v67, 0.0
    %v70 = vmax.f32 %v68, 0.0
    %v71 = vadd.f32 %v69, %v70
    %v72 = vrot.slane %v71, 4
    %v73 = vadd.f32 %v71, %v72
    %v74 = vrot.slane %v73, 2
    %v75 = vadd.f32 %v73, %v74
    %v76 = vrot.slane %v75, 1
    %v77 = vadd.f32 %v75, %v76
    %78 = vst [vmem:[#allocation5] sm:$0x1] %v77
    // Predicated region
    $region10: #{tpu_custom_call.1} parent=1 // pred_check
      _
    $region11: #{tpu_custom_call.1} parent=1 // pred_check_branch
      %80 = sbr.rel (0) target = $region13
    $region12: #{tpu_custom_call.1} parent=1 // pred_region
      %82 = vsyncadd [#allocation4], 0
      %s84 = sshll.u32 [#allocation5], 4
      %s85 = int_to_ptr.vmem [resolvable:$true] %s84
      %s86 = sshll.u32 %s1, 4
      %s87 = int_to_ptr.hbm [resolvable:$true] %s86
      %89 = dma.vmem_to_hbm [thread:$0]  %s85, 16, %s87, [#allocation4]
    $region13: #{tpu_custom_call.1} parent=1 // pred_fallthru
      _
    // Predicated region
    $region14: #{tpu_custom_call.1} parent=1 // pred_check
      _
    $region15: #{tpu_custom_call.1} parent=1 // pred_check_branch
      %91 = sbr.rel (0) target = $region17
    $region16: #{tpu_custom_call.1} parent=1 // pred_region
      %93 = dma.done [#allocation4], 16
    $region17: #{tpu_custom_call.1} parent=1 // pred_fallthru
      _
    %94 = vsyncpa [#allocation3], 1
    %95 = vsyncpa [#allocation4], 1

</llo_original>
